<compile_context>
chip_gen: v6e
topology: v6e:2x2x1
jax: 0.10.0
libtpu: 0.0.40
codegen_flags: <defaults>
</compile_context>

<pallas_src>
import jax
import jax.numpy as jnp
from jax.experimental import pallas as pl
from jax.experimental.pallas import tpu as pltpu


def _round_up(n, m):
    return ((n + m - 1) // m) * m


# ---------------------------------------------------------------------------
# Kernel
# ---------------------------------------------------------------------------
def _integrand_kernel(xt_ref, ht_ref, w1b_ref, w2_ref, c_ref, o_ref):
    """Transposed MLP tile: batch on the lane axis, features on sublanes."""
    xt = xt_ref[...].astype(jnp.float32)          # (dx, bb)
    ht = ht_ref[...].astype(jnp.float32)          # (dh, bb)
    w1b = w1b_ref[...].astype(jnp.float32)        # (H1, dx+dh+1) = [w1 | b1]
    c = c_ref[...].astype(jnp.float32)            # (Hm, out_d+2) = [b2 | w3^T | b3]

    dx = xt.shape[0]
    dh = ht.shape[0]
    H2 = w2_ref.shape[0]
    out_d = c.shape[1] - 2

    # ---- Layer 1: Linear(in_d -> H1) + ReLU as in_d broadcast FMAs (VPU, f32).
    # torch.cat((x, h), 1) is fused by consuming w1's x- and h-columns directly.
    acc = w1b[:, 0:1] * xt[0:1, :]
    for k in range(1, dx):
        acc = acc + w1b[:, k:k + 1] * xt[k:k + 1, :]
    for k in range(dh):
        acc = acc + w1b[:, dx + k:dx + k + 1] * ht[k:k + 1, :]
    h1 = jnp.maximum(acc + w1b[:, dx + dh:dx + dh + 1], 0.0)     # (H1, bb)

    # ---- Layer 2: Linear(H1 -> H2) + ReLU — the only real matmul: bf16 MXU,
    # f32 accumulate.
    h2 = jnp.dot(w2_ref[...], h1.astype(jnp.bfloat16),
                 preferred_element_type=jnp.float32)             # (H2, bb)
    h2 = jnp.maximum(h2 + c[0:H2, 0:1], 0.0)

    # ---- Layer 3: Linear(H2 -> out_d), out_d tiny -> VPU mul + sublane reduce.
    w3t = c[0:H2, 1:1 + out_d]                                   # (H2, out_d)
    cols = [jnp.sum(h2 * w3t[:, j:j + 1], axis=0, keepdims=True)
            for j in range(out_d)]                               # each (1, bb)
    y = cols[0] if out_d == 1 else jnp.concatenate(cols, axis=0)
    y = y + c[0:out_d, 1 + out_d:2 + out_d]                      # + b3

    # ---- ELU(alpha=1) + 1.0; exp(min(y,0)) keeps the dead branch finite.
    elu = jnp.where(y > 0.0, y, jnp.exp(jnp.minimum(y, 0.0)) - 1.0)
    o_ref[...] = (elu + 1.0).astype(o_ref.dtype)                 # lane-dense store


# ---------------------------------------------------------------------------
# Tiling / VMEM policy
# ---------------------------------------------------------------------------
_LANE = 128
_SINGLE_STEP_MAX = 2048     # latency path: one grid step, no tiling
_TARGET_ROWS = 8192         # rows per grid step when tiling (sweep 2048-8192)
_MAX_BLOCK_ROWS = 32768     # cap so footprint stays << v7x's 64 MiB/TC


def _pick_block_b(B, block_b):
    if block_b is None:
        if B <= _SINGLE_STEP_MAX:
            return B
        n_blk = max(2, -(-B // _TARGET_ROWS))        # >= 2 so v7x megacore splits
        bb = _round_up(-(-B // n_blk), _LANE)
        return min(bb, _MAX_BLOCK_ROWS)
    block_b = min(block_b, B)
    if block_b < B:
        block_b = _round_up(block_b, _LANE)          # tiled lane dim 128-aligned
        if block_b >= B:
            block_b = B
    return block_b


def _vmem_bytes_estimate(block_b, dx, dh, H1, H2, out_d):
    pad8 = lambda n: _round_up(max(n, 1), 8)
    io = 2 * 4 * block_b * (pad8(dx) + pad8(dh) + pad8(out_d))   # double-buffered tiles
    mids = (4 * block_b * (H1 + H2)          # h1 / h2 (f32)
            + 2 * block_b * H1               # bf16 copy of h1
            + 4 * block_b * (H2 + 4 * pad8(out_d)))  # layer-3 product + y/elu temps
    return io + mids + (256 << 10)           # weights + slack


# ---------------------------------------------------------------------------
# Wrapper
# ---------------------------------------------------------------------------
def integrand_nn_forward(x, h, params, *, block_b=None):
    """Pallas implementation of IntegrandNN.forward(x, h).

    x: (B, dx), h: (B, dh) with dx + dh == in_d.
    params use PyTorch layout: wL (out_f, in_f), bL (out_f,).
    """
    B, dx = x.shape
    Bh, dh = h.shape
    assert B == Bh
    w1, b1 = params["w1"], params["b1"]
    w2, b2 = params["w2"], params["b2"]
    w3, b3 = params["w3"], params["b3"]
    H1, in_d = w1.shape
    H2 = w2.shape[0]
    out_d = w3.shape[0]
    assert in_d == dx + dh

    block_b = _pick_block_b(B, block_b)
    n_blk = pl.cdiv(B, block_b)

    # Layout plumbing (tiny / fused by XLA): batch -> lane axis.  For 1-wide
    # inputs the "transpose" is a free reshape.  No padding copies: Pallas
    # masks the partial boundary block.
    xT = x.reshape(1, B) if dx == 1 else x.T          # (dx, B)
    hT = h.reshape(1, B) if dh == 1 else h.T          # (dh, B)

    # Packed constant operands (DMA'd once, resident across all grid steps).
    w1b = jnp.concatenate([w1, b1[:, None]], axis=1).astype(jnp.float32)  # (H1, in_d+1)
    w2_bf = w2.astype(jnp.bfloat16)                                       # (H2, H1)
    Hm = max(H2, out_d)
    consts = jnp.zeros((Hm, out_d + 2), jnp.float32)
    consts = consts.at[:H2, 0].set(b2.astype(jnp.float32))
    consts = consts.at[:H2, 1:1 + out_d].set(w3.T.astype(jnp.float32))
    consts = consts.at[:out_d, 1 + out_d].set(b3.astype(jnp.float32))

    full = lambda r, cdim: pl.BlockSpec((r, cdim), lambda i: (0, 0))
    vmem_limit = int(min(
        max(2 * _vmem_bytes_estimate(block_b, dx, dh, H1, H2, out_d), 32 << 20),
        56 << 20))

    out = pl.pallas_call(
        _integrand_kernel,
        out_shape=jax.ShapeDtypeStruct((out_d, B), x.dtype),
        grid_spec=pltpu.PrefetchScalarGridSpec(
            num_scalar_prefetch=0,
            grid=(n_blk,),
            in_specs=[
                pl.BlockSpec((dx, block_b), lambda i: (0, i)),   # x^T tile
                pl.BlockSpec((dh, block_b), lambda i: (0, i)),   # h^T tile
                full(H1, in_d + 1),       # [w1 | b1]
                full(H2, H1),             # w2 (bf16)
                full(Hm, out_d + 2),      # [b2 | w3^T | b3]
            ],
            out_specs=pl.BlockSpec((out_d, block_b), lambda i: (0, i)),
        ),
        compiler_params=pltpu.CompilerParams(
            dimension_semantics=("parallel",),
            vmem_limit_bytes=vmem_limit,
        ),
    )(xT, hT, w1b, w2_bf, consts)

    # Back to the PyTorch (B, out_d) layout.
    return out.T


# ---------------------------------------------------------------------------
# Params + pure-JAX reference
# ---------------------------------------------------------------------------
def init_params(key, in_d, hidden_layers, out_d, dtype=jnp.float32):
    """nn.Linear-style init, stored in PyTorch layout: w (out_f, in_f), b (out_f,)."""
    hs = [in_d] + list(hidden_layers) + [out_d]
    keys = jax.random.split(key, 2 * (len(hs) - 1))
    params = {}
    for li, (h0, h1) in enumerate(zip(hs, hs[1:]), start=1):
        kw, kb = keys[2 * (li - 1)], keys[2 * (li - 1) + 1]
        bound = 1.0 / jnp.sqrt(h0)
        params[f"w{li}"] = jax.random.uniform(kw, (h1, h0), dtype,
                                              minval=-bound, maxval=bound)
        params[f"b{li}"] = jax.random.uniform(kb, (h1,), dtype,
                                              minval=-bound, maxval=bound)
    return params


def _reference(x, h, params):
    """Plain-JAX (f32) reference of the same forward pass."""
    z = jnp.concatenate([x, h], axis=1)
    a1 = jnp.maximum(z @ params["w1"].T + params["b1"], 0.0)
    a2 = jnp.maximum(a1 @ params["w2"].T + params["b2"], 0.0)
    y = a2 @ params["w3"].T + params["b3"]
    elu = jnp.where(y > 0.0, y, jnp.exp(jnp.minimum(y, 0.0)) - 1.0)
    return elu + 1.0


# ---------------------------------------------------------------------------
# Self-test
# ---------------------------------------------------------------------------
if __name__ == "__main__":
    # Module config: in_d = dim(x) + dim(h), two hidden layers, scalar output.
    dx, dh = 1, 3
    in_d = dx + dh
    hidden_layers = [32, 32]
    out_d = 1

    key = jax.random.PRNGKey(0)
    kp, kx, kh, kx2, kh2, kx3, kh3 = jax.random.split(key, 7)
    params = init_params(kp, in_d, hidden_layers, out_d)

    fwd = jax.jit(integrand_nn_forward, static_argnames=("block_b",))

    # Layer 2 runs in bf16 on the MXU -> loosened tolerance vs the f32 reference.
    TOL = dict(atol=3e-2, rtol=3e-2)

    # Case 1: small batch -> single lane-dense grid step (latency path).
    B = 16
    x = jax.random.normal(kx, (B, dx), jnp.float32)
    h = jax.random.normal(kh, (B, dh), jnp.float32)
    out = jax.block_until_ready(fwd(x, h, params))
    ref = _reference(x, h, params)
    assert out.shape == (B, out_d)
    assert jnp.allclose(out, ref, **TOL), float(jnp.max(jnp.abs(out - ref)))

    # Case 2: tiled default path -> >= 2 grid steps (v7x megacore-friendly).
    B2 = 4096
    x2 = jax.random.normal(kx2, (B2, dx), jnp.float32)
    h2 = jax.random.normal(kh2, (B2, dh), jnp.float32)
    out2 = jax.block_until_ready(fwd(x2, h2, params))
    ref2 = _reference(x2, h2, params)
    assert out2.shape == (B2, out_d)
    assert jnp.allclose(out2, ref2, **TOL), float(jnp.max(jnp.abs(out2 - ref2)))

    # Case 3: non-divisible batch with explicit tiling -> masked boundary block,
    # no padding copies.
    B3 = 300
    x3 = jax.random.normal(kx3, (B3, dx), jnp.float32)
    h3 = jax.random.normal(kh3, (B3, dh), jnp.float32)
    out3 = jax.block_until_ready(fwd(x3, h3, params, block_b=128))
    ref3 = _reference(x3, h3, params)
    assert out3.shape == (B3, out_d)
    assert jnp.allclose(out3, ref3, **TOL), float(jnp.max(jnp.abs(out3 - ref3)))

    print("KERNEL_OK")
</pallas_src>

<mosaic_0001>
module attributes {stable_mosaic.version = 11 : i64} {
  func.func @_integrand_kernel(%arg0: i32, %arg1: memref<1x16xf32, #tpu.memory_space<vmem>>, %arg2: memref<3x16xf32, #tpu.memory_space<vmem>>, %arg3: memref<32x5xf32, #tpu.memory_space<vmem>>, %arg4: memref<32x32xbf16, #tpu.memory_space<vmem>>, %arg5: memref<32x3xf32, #tpu.memory_space<vmem>>, %arg6: memref<1x16xf32, #tpu.memory_space<vmem>>) attributes {dimension_semantics = [#tpu.dimension_semantics<parallel>], iteration_bounds = array<i64: 1>, scalar_prefetch = 0 : i64, scratch_operands = 0 : i64, tpu.core_type = #tpu.core_type<tc>, window_params = [{transform_indices = @transform_0, window_bounds = array<i64: 1, 16>}, {transform_indices = @transform_1, window_bounds = array<i64: 3, 16>}, {pipeline_mode = #tpu.pipeline_mode<synchronous>, transform_indices = @transform_2, window_bounds = array<i64: 32, 5>}, {pipeline_mode = #tpu.pipeline_mode<synchronous>, transform_indices = @transform_3, window_bounds = array<i64: 32, 32>}, {pipeline_mode = #tpu.pipeline_mode<synchronous>, transform_indices = @transform_4, window_bounds = array<i64: 32, 3>}, {transform_indices = @transform_5, window_bounds = array<i64: 1, 16>}]} {
    %c0 = arith.constant 0 : index
    %c0_0 = arith.constant 0 : index
    %0 = vector.load %arg1[%c0, %c0_0] : memref<1x16xf32, #tpu.memory_space<vmem>>, vector<1x16xf32>
    %c0_1 = arith.constant 0 : index
    %c0_2 = arith.constant 0 : index
    %1 = vector.load %arg2[%c0_1, %c0_2] : memref<3x16xf32, #tpu.memory_space<vmem>>, vector<3x16xf32>
    %c0_3 = arith.constant 0 : index
    %c0_4 = arith.constant 0 : index
    %2 = vector.load %arg3[%c0_3, %c0_4] : memref<32x5xf32, #tpu.memory_space<vmem>>, vector<32x5xf32>
    %c0_5 = arith.constant 0 : index
    %c0_6 = arith.constant 0 : index
    %3 = vector.load %arg5[%c0_5, %c0_6] : memref<32x3xf32, #tpu.memory_space<vmem>>, vector<32x3xf32>
    %4 = vector.extract_strided_slice %2 {offsets = [0, 0], sizes = [32, 1], strides = [1, 1]} : vector<32x5xf32> to vector<32x1xf32>
    %5 = vector.broadcast %4 : vector<32x1xf32> to vector<32x16xf32>
    %6 = vector.broadcast %0 : vector<1x16xf32> to vector<32x16xf32>
    %7 = arith.mulf %5, %6 : vector<32x16xf32>
    %8 = vector.extract_strided_slice %2 {offsets = [0, 1], sizes = [32, 1], strides = [1, 1]} : vector<32x5xf32> to vector<32x1xf32>
    %9 = vector.extract_strided_slice %1 {offsets = [0, 0], sizes = [1, 16], strides = [1, 1]} : vector<3x16xf32> to vector<1x16xf32>
    %10 = vector.broadcast %8 : vector<32x1xf32> to vector<32x16xf32>
    %11 = vector.broadcast %9 : vector<1x16xf32> to vector<32x16xf32>
    %12 = arith.mulf %10, %11 : vector<32x16xf32>
    %13 = arith.addf %7, %12 : vector<32x16xf32>
    %14 = vector.extract_strided_slice %2 {offsets = [0, 2], sizes = [32, 1], strides = [1, 1]} : vector<32x5xf32> to vector<32x1xf32>
    %15 = vector.extract_strided_slice %1 {offsets = [1, 0], sizes = [1, 16], strides = [1, 1]} : vector<3x16xf32> to vector<1x16xf32>
    %16 = vector.broadcast %14 : vector<32x1xf32> to vector<32x16xf32>
    %17 = vector.broadcast %15 : vector<1x16xf32> to vector<32x16xf32>
    %18 = arith.mulf %16, %17 : vector<32x16xf32>
    %19 = arith.addf %13, %18 : vector<32x16xf32>
    %20 = vector.extract_strided_slice %2 {offsets = [0, 3], sizes = [32, 1], strides = [1, 1]} : vector<32x5xf32> to vector<32x1xf32>
    %21 = vector.extract_strided_slice %1 {offsets = [2, 0], sizes = [1, 16], strides = [1, 1]} : vector<3x16xf32> to vector<1x16xf32>
    %22 = vector.broadcast %20 : vector<32x1xf32> to vector<32x16xf32>
    %23 = vector.broadcast %21 : vector<1x16xf32> to vector<32x16xf32>
    %24 = arith.mulf %22, %23 : vector<32x16xf32>
    %25 = arith.addf %19, %24 : vector<32x16xf32>
    %26 = vector.extract_strided_slice %2 {offsets = [0, 4], sizes = [32, 1], strides = [1, 1]} : vector<32x5xf32> to vector<32x1xf32>
    %27 = vector.broadcast %26 : vector<32x1xf32> to vector<32x16xf32>
    %28 = arith.addf %25, %27 : vector<32x16xf32>
    %cst = arith.constant 0.000000e+00 : f32
    %29 = vector.broadcast %cst : f32 to vector<32x16xf32>
    %30 = arith.maximumf %28, %29 : vector<32x16xf32>
    %c0_7 = arith.constant 0 : index
    %c0_8 = arith.constant 0 : index
    %31 = vector.load %arg4[%c0_7, %c0_8] : memref<32x32xbf16, #tpu.memory_space<vmem>>, vector<32x32xbf16>
    %32 = arith.truncf %30 : vector<32x16xf32> to vector<32x16xbf16>
    %cst_9 = arith.constant dense<0.000000e+00> : vector<32x16xf32>
    %33 = tpu.matmul %31, %32, %cst_9 {dimension_numbers = #tpu.dot_dimension_numbers<[1], [0], [0], [1], [0, 0, 1, 1], [], []>} : vector<32x32xbf16>, vector<32x16xbf16>, vector<32x16xf32> -> vector<32x16xf32>
    %34 = vector.extract_strided_slice %3 {offsets = [0, 0], sizes = [32, 1], strides = [1, 1]} : vector<32x3xf32> to vector<32x1xf32>
    %35 = vector.broadcast %34 : vector<32x1xf32> to vector<32x16xf32>
    %36 = arith.addf %33, %35 : vector<32x16xf32>
    %cst_10 = arith.constant 0.000000e+00 : f32
    %37 = vector.broadcast %cst_10 : f32 to vector<32x16xf32>
    %38 = arith.maximumf %36, %37 : vector<32x16xf32>
    %39 = vector.extract_strided_slice %3 {offsets = [0, 1], sizes = [32, 1], strides = [1, 1]} : vector<32x3xf32> to vector<32x1xf32>
    %40 = vector.broadcast %39 : vector<32x1xf32> to vector<32x16xf32>
    %41 = arith.mulf %38, %40 : vector<32x16xf32>
    %cst_11 = arith.constant dense<0.000000e+00> : vector<16xf32>
    %42 = vector.multi_reduction <add>, %41, %cst_11 [0] : vector<32x16xf32> to vector<16xf32>
    %43 = vector.shape_cast %42 : vector<16xf32> to vector<1x16xf32>
    %44 = vector.extract_strided_slice %3 {offsets = [0, 2], sizes = [1, 1], strides = [1, 1]} : vector<32x3xf32> to vector<1x1xf32>
    %45 = vector.broadcast %44 : vector<1x1xf32> to vector<1x16xf32>
    %46 = arith.addf %43, %45 : vector<1x16xf32>
    %cst_12 = arith.constant 0.000000e+00 : f32
    %47 = vector.broadcast %cst_12 : f32 to vector<1x16xf32>
    %48 = arith.cmpf ogt, %46, %47 : vector<1x16xf32>
    %cst_13 = arith.constant 0.000000e+00 : f32
    %49 = vector.broadcast %cst_13 : f32 to vector<1x16xf32>
    %50 = arith.minimumf %46, %49 : vector<1x16xf32>
    %51 = math.exp %50 : vector<1x16xf32>
    %cst_14 = arith.constant 1.000000e+00 : f32
    %52 = vector.broadcast %cst_14 : f32 to vector<1x16xf32>
    %53 = arith.subf %51, %52 : vector<1x16xf32>
    %54 = arith.select %48, %46, %53 : vector<1x16xi1>, vector<1x16xf32>
    %cst_15 = arith.constant 1.000000e+00 : f32
    %55 = vector.broadcast %cst_15 : f32 to vector<1x16xf32>
    %56 = arith.addf %54, %55 : vector<1x16xf32>
    %c0_16 = arith.constant 0 : index
    %c0_17 = arith.constant 0 : index
    %57 = vector.load %arg6[%c0_16, %c0_17] : memref<1x16xf32, #tpu.memory_space<vmem>>, vector<1x16xf32>
    tpu.vector_store %arg6[%c0_16, %c0_17], %56 {strides = array<i32>} : memref<1x16xf32, #tpu.memory_space<vmem>>, vector<1x16xf32>,
    return
  }
  func.func @transform_0(%arg0: i32) -> (i32, i32) {
    %c0_i32 = arith.constant 0 : i32
    %c0_i32_0 = arith.constant 0 : i32
    return %c0_i32, %arg0 : i32, i32
  }
  func.func @transform_1(%arg0: i32) -> (i32, i32) {
    %c0_i32 = arith.constant 0 : i32
    %c0_i32_0 = arith.constant 0 : i32
    return %c0_i32, %arg0 : i32, i32
  }
  func.func @transform_2(%arg0: i32) -> (i32, i32) {
    %c0_i32 = arith.constant 0 : i32
    %c0_i32_0 = arith.constant 0 : i32
    %c0_i32_1 = arith.constant 0 : i32
    return %c0_i32, %c0_i32_0 : i32, i32
  }
  func.func @transform_3(%arg0: i32) -> (i32, i32) {
    %c0_i32 = arith.constant 0 : i32
    %c0_i32_0 = arith.constant 0 : i32
    %c0_i32_1 = arith.constant 0 : i32
    return %c0_i32, %c0_i32_0 : i32, i32
  }
  func.func @transform_4(%arg0: i32) -> (i32, i32) {
    %c0_i32 = arith.constant 0 : i32
    %c0_i32_0 = arith.constant 0 : i32
    %c0_i32_1 = arith.constant 0 : i32
    return %c0_i32, %c0_i32_0 : i32, i32
  }
  func.func @transform_5(%arg0: i32) -> (i32, i32) {
    %c0_i32 = arith.constant 0 : i32
    %c0_i32_0 = arith.constant 0 : i32
    return %c0_i32, %arg0 : i32, i32
  }
}

</mosaic_0001>

<llo_original>
// kernel: integrand_nn_forward.1
$region0: #{integrand_nn_forward.1}
  #allocation0 [shape = 'u32[]', space=smem, size = 0x4, offset = 0x4, fixed_abs, tag = 'smem constant byte address 0x4 - core index']
  #allocation1 [shape = 'u32[144,128]{1,0:T(1,128)}', space=vmem, size = 0x12000, scoped, tag = 'internal scratch']
  %s0 = inlined_call_operand.vmem [shape: f32[1,16], index: 0, kind: input, shape index: {}]
  %s1 = inlined_call_operand.vmem [shape: f32[3,16], index: 1, kind: input, shape index: {}]
  %s2 = inlined_call_operand.vmem [shape: f32[32,5], index: 2, kind: input, shape index: {}]
  %s3 = inlined_call_operand.vmem [shape: bf16[32,32], index: 3, kind: input, shape index: {}]
  %s4 = inlined_call_operand.vmem [shape: f32[32,3], index: 4, kind: input, shape index: {}]
  %s5 = inlined_call_operand.hbm [shape: f32[1,16], index: 5, kind: output, shape index: {}]
  %s6 = sld [smem:[#allocation0]]
  $region30: #{integrand_nn_forward.1} parent=0
    _
  %s8 = ssub.s32 1, %s6
  %s9 = scalar_select 0, %s8, %s6
  $region1: #{integrand_nn_forward.1} parent=0
    #allocation2 [shape = 'u8[512]{0}', space=vmem, size = 0x400, scoped, tag = 'output window, operand 0, single buffered']
    #allocation3 [shape = 's32[1]{0}', space=sflag, size = 0x4, scoped, tag = 'scoped memory for integrand_nn_forward.1']
    %10 = vsyncpa [#allocation3], 0
    // Predicated region
    $region2: #{integrand_nn_forward.1} parent=1 // pred_check
      _
    $region3: #{integrand_nn_forward.1} parent=1 // pred_check_branch
      %12 = sbr.rel (0) target = $region5
    $region4: #{integrand_nn_forward.1} parent=1 // pred_region
      _
    $region5: #{integrand_nn_forward.1} parent=1 // pred_fallthru
      _
    // Predicated region
    $region6: #{integrand_nn_forward.1} parent=1 // pred_check
      _
    $region7: #{integrand_nn_forward.1} parent=1 // pred_check_branch
      %14 = sbr.rel (0) target = $region9
    $region8: #{integrand_nn_forward.1} parent=1 // pred_region
      _
    $region9: #{integrand_nn_forward.1} parent=1 // pred_fallthru
      _
    // Predicated region
    $region10: #{integrand_nn_forward.1} parent=1 // pred_check
      _
    $region11: #{integrand_nn_forward.1} parent=1 // pred_check_branch
      %16 = sbr.rel (0) target = $region13
    $region12: #{integrand_nn_forward.1} parent=1 // pred_region
      _
    $region13: #{integrand_nn_forward.1} parent=1 // pred_fallthru
      _
    // Predicated region
    $region14: #{integrand_nn_forward.1} parent=1 // pred_check
      _
    $region15: #{integrand_nn_forward.1} parent=1 // pred_check_branch
      %18 = sbr.rel (0) target = $region17
    $region16: #{integrand_nn_forward.1} parent=1 // pred_region
      _
    $region17: #{integrand_nn_forward.1} parent=1 // pred_fallthru
      _
    // Predicated region
    $region18: #{integrand_nn_forward.1} parent=1 // pred_check
      _
    $region19: #{integrand_nn_forward.1} parent=1 // pred_check_branch
      %20 = sbr.rel (0) target = $region21
    $region20: #{integrand_nn_forward.1} parent=1 // pred_region
      _
    $region21: #{integrand_nn_forward.1} parent=1 // pred_fallthru
      _
    %v22 = vld [vmem:[%s0] sm:$0x1]
    %v23 = vld [vmem:[%s1] sm:$0x7]
    %v24 = vld [vmem:[%s2] sm:$0xff]
    %v25 = vld [vmem:[%s2 + $0x8] sm:$0xff]
    %v26 = vld [vmem:[%s2 + $0x10] sm:$0xff]
    %v27 = vld [vmem:[%s2 + $0x18] sm:$0xff]
    %v28 = vld [vmem:[%s4] sm:$0xff]
    %v29 = vld [vmem:[%s4 + $0x8] sm:$0xff]
    %v30 = vld [vmem:[%s4 + $0x10] sm:$0xff]
    %v31 = vld [vmem:[%s4 + $0x18] sm:$0xff]
    %33 = vset.pattern.permute.xlu0 0
    %34 = vperm.xlu0 %33, %v24
    %v35 = vpop.permute.xlu0 %34
    %38 = vset.pattern.permute.xlu0 0
    %39 = vperm.xlu0 %38, %v25
    %v40 = vpop.permute.xlu0 %39
    %43 = vset.pattern.permute.xlu0 0
    %44 = vperm.xlu0 %43, %v26
    %v45 = vpop.permute.xlu0 %44
    %48 = vset.pattern.permute.xlu0 0
    %49 = vperm.xlu0 %48, %v27
    %v50 = vpop.permute.xlu0 %49
    %v53 = vlaneseq
    %v54 = vshrl.u32 %v53, 7
    %v55 = vsub.s32 0, %v54
    %v56 = vrot.slane %v22, %v55
    %v58 = vmul.f32 %v35, %v56
    %v59 = vmul.f32 %v40, %v56
    %v60 = vmul.f32 %v45, %v56
    %v61 = vmul.f32 %v50, %v56
    %62 = vset.pattern.permute.xlu0 1
    %63 = vperm.xlu0 %62, %v24
    %v64 = vpop.permute.xlu0 %63
    %66 = vset.pattern.permute.xlu0 1
    %67 = vperm.xlu0 %66, %v25
    %v68 = vpop.permute.xlu0 %67
    %70 = vset.pattern.permute.xlu0 1
    %71 = vperm.xlu0 %70, %v26
    %v72 = vpop.permute.xlu0 %71
    %74 = vset.pattern.permute.xlu0 1
    %75 = vperm.xlu0 %74, %v27
    %v76 = vpop.permute.xlu0 %75
    %v78 = vlaneseq
    %v79 = vshrl.u32 %v78, 7
    %v80 = vsub.s32 0, %v79
    %v81 = vrot.slane %v23, %v80
    %v82 = vmul.f32 %v64, %v81
    %v83 = vmul.f32 %v68, %v81
    %v84 = vmul.f32 %v72, %v81
    %v85 = vmul.f32 %v76, %v81
    %v86 = vadd.f32 %v58, %v82
    %v87 = vadd.f32 %v59, %v83
    %v88 = vadd.f32 %v60, %v84
    %v89 = vadd.f32 %v61, %v85
    %90 = vset.pattern.permute.xlu0 2
    %91 = vperm.xlu0 %90, %v24
    %v92 = vpop.permute.xlu0 %91
    %94 = vset.pattern.permute.xlu0 2
    %95 = vperm.xlu0 %94, %v25
    %v96 = vpop.permute.xlu0 %95
    %98 = vset.pattern.permute.xlu0 2
    %99 = vperm.xlu0 %98, %v26
    %v100 = vpop.permute.xlu0 %99
    %102 = vset.pattern.permute.xlu0 2
    %103 = vperm.xlu0 %102, %v27
    %v104 = vpop.permute.xlu0 %103
    %v106 = vlaneseq
    %v107 = vshrl.u32 %v106, 7
    %v108 = vsub.s32 1, %v107
    %v109 = vrot.slane %v23, %v108
    %v110 = vmul.f32 %v92, %v109
    %v111 = vmul.f32 %v96, %v109
    %v112 = vmul.f32 %v100, %v109
    %v113 = vmul.f32 %v104, %v109
    %v114 = vadd.f32 %v86, %v110
    %v115 = vadd.f32 %v87, %v111
    %v116 = vadd.f32 %v88, %v112
    %v117 = vadd.f32 %v89, %v113
    %118 = vset.pattern.permute.xlu0 3
    %119 = vperm.xlu0 %118, %v24
    %v120 = vpop.permute.xlu0 %119
    %122 = vset.pattern.permute.xlu0 3
    %123 = vperm.xlu0 %122, %v25
    %v124 = vpop.permute.xlu0 %123
    %126 = vset.pattern.permute.xlu0 3
    %127 = vperm.xlu0 %126, %v26
    %v128 = vpop.permute.xlu0 %127
    %130 = vset.pattern.permute.xlu0 3
    %131 = vperm.xlu0 %130, %v27
    %v132 = vpop.permute.xlu0 %131
    %v134 = vlaneseq
    %v135 = vshrl.u32 %v134, 7
    %v136 = vsub.s32 2, %v135
    %v137 = vrot.slane %v23, %v136
    %v138 = vmul.f32 %v120, %v137
    %v139 = vmul.f32 %v124, %v137
    %v140 = vmul.f32 %v128, %v137
    %v141 = vmul.f32 %v132, %v137
    %v142 = vadd.f32 %v114, %v138
    %v143 = vadd.f32 %v115, %v139
    %v144 = vadd.f32 %v116, %v140
    %v145 = vadd.f32 %v117, %v141
    %146 = vset.pattern.permute.xlu0 4
    %147 = vperm.xlu0 %146, %v24
    %v148 = vpop.permute.xlu0 %147
    %150 = vset.pattern.permute.xlu0 4
    %151 = vperm.xlu0 %150, %v25
    %v152 = vpop.permute.xlu0 %151
    %154 = vset.pattern.permute.xlu0 4
    %155 = vperm.xlu0 %154, %v26
    %v156 = vpop.permute.xlu0 %155
    %158 = vset.pattern.permute.xlu0 4
    %159 = vperm.xlu0 %158, %v27
    %v160 = vpop.permute.xlu0 %159
    %v162 = vadd.f32 %v142, %v148
    %v163 = vadd.f32 %v143, %v152
    %v164 = vadd.f32 %v144, %v156
    %v165 = vadd.f32 %v145, %v160
    %v166 = vmax.f32 %v162, 0.0
    %v167 = vmax.f32 %v163, 0.0
    %v168 = vmax.f32 %v164, 0.0
    %v169 = vmax.f32 %v165, 0.0
    %v170 = vld [vmem:[%s3] sm:$0xf]
    %v171 = vld [vmem:[%s3 + $0x4] sm:$0xf]
    %v172 = vld [vmem:[%s3 + $0x8] sm:$0xf]
    %v173 = vld [vmem:[%s3 + $0xc] sm:$0xf]
    %v174 = vpack.c.bf16 %v167, %v166
    %v175 = vpack.c.bf16 %v169, %v168
    %177 = vset.pattern.permute.xlu0 0
    %178 = vperm.xlu0 %177, %v28
    %v179 = vpop.permute.xlu0 %178
    %182 = vset.pattern.permute.xlu0 0
    %183 = vperm.xlu0 %182, %v29
    %v184 = vpop.permute.xlu0 %183
    %187 = vset.pattern.permute.xlu0 0
    %188 = vperm.xlu0 %187, %v30
    %v189 = vpop.permute.xlu0 %188
    %192 = vset.pattern.permute.xlu0 0
    %193 = vperm.xlu0 %192, %v31
    %v194 = vpop.permute.xlu0 %193
    %v200 = vunpack.c.l.b16 %v170
    %v201 = vunpack.c.l.b16 %v171
    %v202 = vunpack.c.l.b16 %v172
    %v203 = vunpack.c.l.b16 %v173
    %v204 = vpack.c.b16 %v201, %v200
    %v205 = vpack.c.b16 %v203, %v202
    %vm206 = vcmask 261120
    %v208 = vsel %vm206, %v204, 0
    %v211 = vsel %vm206, %v205, 0
    %213 = vmatprep.subr.bf16.mxu0 0
    %214 = vmatpush1.bf16.msra.mxu0 0
    %215 = vmatprep.subr.bf16.mxu0 0
    %216 = vmatpush1.bf16.msra.mxu0 0
    %217 = vmatprep.subr.bf16.mxu0 0
    %218 = vmatpush1.bf16.msra.mxu0 0
    %219 = vmatprep.subr.bf16.mxu0 0
    %220 = vmatpush1.bf16.msra.mxu0 0
    %221 = vmatprep.subr.bf16.mxu0 0
    %222 = vmatpush1.bf16.msra.mxu0 0
    %223 = vmatprep.subr.bf16.mxu0 0
    %224 = vmatpush1.bf16.msra.mxu0 0
    %225 = vmatprep.subr.bf16.mxu0 0
    %226 = vmatpush1.bf16.msra.mxu0 %v175
    %227 = vmatprep.subr.bf16.mxu0 0
    %228 = vmatpush1.bf16.msra.mxu0 %v174
    %229 = vmatprep.subr.bf16.mxu0 0
    %230 = vmatpush2.bf16.msra.mxu0 0
    %231 = vmatprep.subr.bf16.mxu0 0
    %232 = vmatpush2.bf16.msra.mxu0 0
    %233 = vmatprep.subr.bf16.mxu0 0
    %234 = vmatpush2.bf16.msra.mxu0 0
    %235 = vmatprep.subr.bf16.mxu0 0
    %236 = vmatpush2.bf16.msra.mxu0 0
    %237 = vmatprep.subr.bf16.mxu0 0
    %238 = vmatpush2.bf16.msra.mxu0 0
    %239 = vmatprep.subr.bf16.mxu0 0
    %240 = vmatpush2.bf16.msra.mxu0 0
    %241 = vmatprep.subr.bf16.mxu0 0
    %242 = vmatpush2.bf16.msra.mxu0 0
    %243 = vmatprep.subr.bf16.mxu0 0
    %244 = vmatpush2.bf16.msra.mxu0 0
    %245 = vmatprep.mubr.bf16.mxu0 0
    %246 = vmatmul.mubr.bf16.gmra.mxu0 %v208
    %v247 = vpop.f32.mrf.mxu0
    %v248 = vadd.f32 %v179, %v247
    %v249 = vpop.f32.mrf.mxu0
    %v250 = vpop.f32.mrf.mxu0
    %v251 = vadd.f32 %v184, %v250
    %v252 = vpop.f32.mrf.mxu0
    %253 = vmatprep.mubr.bf16.mxu0 0
    %254 = vmatmul.mubr.bf16.gmra.mxu0 %v211
    %v255 = vpop.f32.mrf.mxu0
    %v256 = vadd.f32 %v189, %v255
    %v257 = vpop.f32.mrf.mxu0
    %v258 = vpop.f32.mrf.mxu0
    %v259 = vadd.f32 %v194, %v258
    %v260 = vpop.f32.mrf.mxu0
    %261 = vdwg.mxu0
    %v262 = vmax.f32 %v248, 0.0
    %v263 = vmax.f32 %v251, 0.0
    %v264 = vmax.f32 %v256, 0.0
    %v265 = vmax.f32 %v259, 0.0
    %266 = vset.pattern.permute.xlu0 1
    %267 = vperm.xlu0 %266, %v28
    %v268 = vpop.permute.xlu0 %267
    %270 = vset.pattern.permute.xlu0 1
    %271 = vperm.xlu0 %270, %v29
    %v272 = vpop.permute.xlu0 %271
    %274 = vset.pattern.permute.xlu0 1
    %275 = vperm.xlu0 %274, %v30
    %v276 = vpop.permute.xlu0 %275
    %278 = vset.pattern.permute.xlu0 1
    %279 = vperm.xlu0 %278, %v31
    %v280 = vpop.permute.xlu0 %279
    %v282 = vmul.f32 %v262, %v268
    %v283 = vmul.f32 %v263, %v272
    %v284 = vmul.f32 %v264, %v276
    %v285 = vmul.f32 %v265, %v280
    %vm286 = vcmask 130048
    %v287 = vsel %vm286, %v282, 0.0
    %v288 = vsel %vm286, %v283, 0.0
    %v289 = vadd.f32 %v287, %v288
    %v290 = vsel %vm286, %v284, 0.0
    %v291 = vadd.f32 %v289, %v290
    %v292 = vsel %vm286, %v285, 0.0
    %v293 = vadd.f32 %v291, %v292
    %v294 = vrot.slane %v293, 4
    %v295 = vadd.f32 %v293, %v294
    %v296 = vrot.slane %v295, 2
    %v297 = vadd.f32 %v295, %v296
    %v298 = vrot.slane %v297, 1
    %v299 = vadd.f32 %v297, %v298
    %300 = vset.pattern.permute.xlu0 2
    %301 = vperm.xlu0 %300, %v28
    %v302 = vpop.permute.xlu0 %301
    %v304 = vadd.f32 %v299, %v302
    %vm305 = vcmp.gt.f32.partialorder %v304, 0.0
    %v306 = vmin.f32 %v304, 0.0
    %v307 = vmul.f32 %v306, 1.442695
    %v308 = vpow.pop %v307
    %v309 = vsub.f32 %v308, 1.0
    %v310 = vsel %vm305, %v304, %v309
    %v311 = vadd.f32 %v310, 1.0
    %vm312 = vcmask 122880
    %313 = vst.msk [vmem:[#allocation2] sm:$0x1] %vm312, %v311
    // Predicated region
    $region22: #{integrand_nn_forward.1} parent=1 // pred_check
      _
    $region23: #{integrand_nn_forward.1} parent=1 // pred_check_branch
      %315 = sbr.rel (0) target = $region25
    $region24: #{integrand_nn_forward.1} parent=1 // pred_region
      %s317 = ssub.s32 16, 16
      %318 = vsyncadd [#allocation3], %s317
      %s320 = sshll.u32 [#allocation2], 4
      %s321 = int_to_ptr.vmem [resolvable:$true] %s320
      %323 = dma.vmem_to_hbm [thread:$0]  %s321, 16, %s5, [#allocation3]
    $region25: #{integrand_nn_forward.1} parent=1 // pred_fallthru
      _
    // Predicated region
    $region26: #{integrand_nn_forward.1} parent=1 // pred_check
      _
    $region27: #{integrand_nn_forward.1} parent=1 // pred_check_branch
      %325 = sbr.rel (0) target = $region29
    $region28: #{integrand_nn_forward.1} parent=1 // pred_region
      %326 = dma.done [#allocation3], 16
    $region29: #{integrand_nn_forward.1} parent=1 // pred_fallthru
      _
    %327 = vsyncpa [#allocation3], 1

</llo_original>
